<compile_context>
chip_gen: v5e
topology: v5e:2x2
jax: 0.10.0
libtpu: 0.0.40
codegen_flags: <defaults>
</compile_context>

<pallas_src>
import functools

import jax
import jax.numpy as jnp
from jax.experimental import pallas as pl
from jax.experimental.pallas import tpu as pltpu


def _disc_kernel(x_ref, w_ref, b_ref, o_ref):
    """One batch tile: x [TB, F] -> sigmoid(leaky_relu(x @ w + b)) as a lane-dense [1, TB] row."""
    x = x_ref[...].astype(jnp.float32)        # [TB, F]  (VMEM tile)
    w = w_ref[...].astype(jnp.float32)        # [F, 1]   (resident across the grid)
    b = b_ref[0].astype(jnp.float32)          # scalar   (SMEM)

    # One XLU transpose; the weighted reduce then runs along the sublane axis
    # (VPU vreg adds + one small sublane reduce) and lands directly in the
    # lane-dense [1, TB] layout of the output block -- no per-row cross-lane
    # reduce and no second transpose of a sparse [TB, 1] column.
    xt = jnp.transpose(x, (1, 0))                         # [F, TB]
    y = jnp.sum(xt * w, axis=0, keepdims=True) + b        # [1, TB]

    y = jnp.where(y >= 0.0, y, 0.2 * y)                   # LeakyReLU(negative_slope=0.2)
    o_ref[...] = jax.nn.sigmoid(y).astype(o_ref.dtype)


def _round_up(x, m):
    return (x + m - 1) // m * m


@functools.partial(jax.jit, static_argnames=("block_batch",))
def discriminator_forward(z_nero, weight, bias, *, block_batch=32768):
    """sigmoid(leaky_relu(z_nero @ weight.T + bias, 0.2)).

    z_nero: [B, 2H] float (f32 or bf16)
    weight: [1, 2H] f32   (torch nn.Linear(2H, 1).weight layout)
    bias:   [1]     f32   (torch nn.Linear(2H, 1).bias layout)
    returns [B, 1]  f32
    """
    B, F = z_nero.shape
    assert weight.shape == (1, F)
    assert bias.shape == (1,)

    # Batch tile: multiple of 128 (lane-dense [1, TB] output row, sublane-aligned
    # [TB, F] input block), sized so one input buffer stays near ~8 MiB of VMEM
    # *including* the lane padding when F < 128 (f32 rows pad to 128 lanes).
    padded_row_bytes = _round_up(F, 128) * 4
    vmem_cap = max(128, (8 * 1024 * 1024 // padded_row_bytes) // 128 * 128)
    tb = min(_round_up(int(block_batch), 128), vmem_cap, _round_up(B, 128))
    num_tiles = pl.cdiv(B, tb)

    w_col = weight.reshape(F, 1).astype(jnp.float32)   # [F, 1] column, resident in VMEM
    b_vec = bias.astype(jnp.float32)

    out = pl.pallas_call(
        _disc_kernel,
        out_shape=jax.ShapeDtypeStruct((1, B), jnp.float32),
        grid=(num_tiles,),
        in_specs=[
            pl.BlockSpec((tb, F), lambda i: (i, 0)),            # batch tile of z_nero
            pl.BlockSpec((F, 1), lambda i: (0, 0)),             # weight column, resident
            pl.BlockSpec(memory_space=pltpu.MemorySpace.SMEM),  # bias scalar in SMEM
        ],
        out_specs=pl.BlockSpec((1, tb), lambda i: (0, i)),      # lane-dense output row
        compiler_params=pltpu.CompilerParams(
            dimension_semantics=("parallel",),     # independent batch tiles (megacore-safe)
            vmem_limit_bytes=48 * 1024 * 1024,     # headroom on v7x (64 MiB physical),
                                                   # well under v5e/v6e's 128 MiB physical
        ),
    )(z_nero, w_col, b_vec)

    return out[0].reshape(B, 1)


if __name__ == "__main__":
    # Small shapes consistent with the module: hiddenSize=32 -> in_features = 64.
    hidden_size = 32
    feat = hidden_size * 2
    batch = 300          # deliberately NOT a multiple of 128: exercises the ragged boundary block

    key = jax.random.PRNGKey(0)
    k_x, k_w, k_b = jax.random.split(key, 3)

    # Deterministic params mimicking torch.nn.Linear default init:
    # U(-1/sqrt(fan_in), 1/sqrt(fan_in)); weight kept in torch's [out, in] = [1, 2H] layout.
    bound = 1.0 / (feat ** 0.5)
    weight = jax.random.uniform(k_w, (1, feat), jnp.float32, -bound, bound)
    bias = jax.random.uniform(k_b, (1,), jnp.float32, -bound, bound)
    z_nero = jax.random.normal(k_x, (batch, feat), jnp.float32)

    # Default tiling (single tile at this small B) ...
    out = discriminator_forward(z_nero, weight, bias)
    out = jax.block_until_ready(out)
    # ... and a forced multi-tile run (3 tiles of 128 + ragged tail) to exercise the grid path.
    out_tiled = discriminator_forward(z_nero, weight, bias, block_batch=128)
    out_tiled = jax.block_until_ready(out_tiled)

    # Pure-JAX reference with the same semantics as the torch module
    # (elementwise form avoids any matmul-precision ambiguity in the reference itself).
    ref = jnp.sum(z_nero * weight, axis=-1, keepdims=True) + bias
    ref = jnp.where(ref >= 0.0, ref, 0.2 * ref)
    ref = jax.nn.sigmoid(ref)

    assert out.shape == (batch, 1)
    assert out_tiled.shape == (batch, 1)
    assert jnp.allclose(out, ref, atol=1e-5, rtol=1e-5), "mismatch vs reference (default tiling)"
    assert jnp.allclose(out_tiled, ref, atol=1e-5, rtol=1e-5), "mismatch vs reference (multi-tile)"
    print("KERNEL_OK")
</pallas_src>

<mosaic_0001>
module attributes {stable_mosaic.version = 11 : i64} {
  func.func @_disc_kernel(%arg0: i32, %arg1: memref<384x64xf32, #tpu.memory_space<vmem>>, %arg2: memref<64x1xf32, #tpu.memory_space<vmem>>, %arg3: memref<1xf32, #tpu.memory_space<smem>>, %arg4: memref<1x384xf32, #tpu.memory_space<vmem>>) attributes {dimension_semantics = [#tpu.dimension_semantics<parallel>], iteration_bounds = array<i64: 1>, scalar_prefetch = 0 : i64, scratch_operands = 0 : i64, tpu.core_type = #tpu.core_type<tc>, window_params = [{transform_indices = @transform_0, window_bounds = array<i64: 384, 64>}, {pipeline_mode = #tpu.pipeline_mode<synchronous>, transform_indices = @transform_1, window_bounds = array<i64: 64, 1>}, {transform_indices = @transform_2, window_bounds = array<i64: 1>}, {transform_indices = @transform_3, window_bounds = array<i64: 1, 384>}]} {
    %c0 = arith.constant 0 : index
    %c0_0 = arith.constant 0 : index
    %0 = vector.load %arg1[%c0, %c0_0] : memref<384x64xf32, #tpu.memory_space<vmem>>, vector<384x64xf32>
    %c0_1 = arith.constant 0 : index
    %c0_2 = arith.constant 0 : index
    %1 = vector.load %arg2[%c0_1, %c0_2] : memref<64x1xf32, #tpu.memory_space<vmem>>, vector<64x1xf32>
    %c0_3 = arith.constant 0 : index
    %2 = memref.load %arg3[%c0_3] : memref<1xf32, #tpu.memory_space<smem>>
    %3 = tpu.transpose %0, [1, 0] : vector<384x64xf32> -> vector<64x384xf32>
    %4 = vector.broadcast %1 : vector<64x1xf32> to vector<64x384xf32>
    %5 = arith.mulf %3, %4 : vector<64x384xf32>
    %cst = arith.constant dense<0.000000e+00> : vector<384xf32>
    %6 = vector.multi_reduction <add>, %5, %cst [0] : vector<64x384xf32> to vector<384xf32>
    %7 = vector.shape_cast %6 : vector<384xf32> to vector<1x384xf32>
    %8 = vector.broadcast %2 : f32 to vector<1x384xf32>
    %9 = arith.addf %7, %8 : vector<1x384xf32>
    %cst_4 = arith.constant 0.000000e+00 : f32
    %10 = vector.broadcast %cst_4 : f32 to vector<1x384xf32>
    %11 = arith.cmpf oge, %9, %10 : vector<1x384xf32>
    %cst_5 = arith.constant 2.000000e-01 : f32
    %12 = vector.broadcast %cst_5 : f32 to vector<1x384xf32>
    %13 = arith.mulf %12, %9 : vector<1x384xf32>
    %14 = arith.select %11, %9, %13 : vector<1x384xi1>, vector<1x384xf32>
    %15 = arith.negf %14 : vector<1x384xf32>
    %16 = math.exp %15 : vector<1x384xf32>
    %cst_6 = arith.constant 1.000000e+00 : f32
    %17 = vector.broadcast %cst_6 : f32 to vector<1x384xf32>
    %18 = arith.addf %17, %16 : vector<1x384xf32>
    %19 = arith.divf %17, %18 : vector<1x384xf32>
    %c0_7 = arith.constant 0 : index
    %c0_8 = arith.constant 0 : index
    %20 = vector.load %arg4[%c0_7, %c0_8] : memref<1x384xf32, #tpu.memory_space<vmem>>, vector<1x384xf32>
    tpu.vector_store %arg4[%c0_7, %c0_8], %19 {strides = array<i32>} : memref<1x384xf32, #tpu.memory_space<vmem>>, vector<1x384xf32>,
    return
  }
  func.func @transform_0(%arg0: i32) -> (i32, i32) {
    %c0_i32 = arith.constant 0 : i32
    %c0_i32_0 = arith.constant 0 : i32
    return %arg0, %c0_i32 : i32, i32
  }
  func.func @transform_1(%arg0: i32) -> (i32, i32) {
    %c0_i32 = arith.constant 0 : i32
    %c0_i32_0 = arith.constant 0 : i32
    %c0_i32_1 = arith.constant 0 : i32
    return %c0_i32, %c0_i32_0 : i32, i32
  }
  func.func @transform_2(%arg0: i32) -> i32 {
    %c0_i32 = arith.constant 0 : i32
    %c0_i32_0 = arith.constant 0 : i32
    return %c0_i32 : i32
  }
  func.func @transform_3(%arg0: i32) -> (i32, i32) {
    %c0_i32 = arith.constant 0 : i32
    %c0_i32_0 = arith.constant 0 : i32
    return %c0_i32, %arg0 : i32, i32
  }
}

</mosaic_0001>

<llo_original>
// kernel: discriminator_forward.1
$region0: #{discriminator_forward.1}
  #allocation0 [shape = 'u32[]', space=smem, size = 0x4, offset = 0x4, fixed_abs, tag = 'smem constant byte address 0x4 - core index']
  #allocation1 [shape = 'u32[72,128]{1,0:T(1,128)}', space=vmem, size = 0x9000, scoped, tag = 'internal scratch']
  #allocation2 [shape = 'f32[1]{0:T(128)S(6)}', space=smem, size = 0x200, scoped, tag = 'scoped memory for discriminator_forward.1']
  %s0 = inlined_call_operand.vmem [shape: f32[300,64], index: 0, kind: input, shape index: {}]
  %s1 = inlined_call_operand.vmem [shape: f32[64,1], index: 1, kind: input, shape index: {}]
  %s2 = inlined_call_operand.<no memory space> [shape: f32[1], index: 2, kind: input, shape index: {}]
  %s3 = inlined_call_operand.hbm [shape: f32[1,300], index: 3, kind: output, shape index: {}]
  %s4 = sld [smem:[#allocation0]]
  $region22: #{discriminator_forward.1} parent=0
    _
  %s6 = ssub.s32 1, %s4
  %s7 = scalar_select 0, %s6, %s4
  %8 = sst [smem:[#allocation2]] %s2
  $region1: #{discriminator_forward.1} parent=0
    #allocation3 [shape = 'u8[1536]{0}', space=vmem, size = 0x800, scoped, tag = 'output window, operand 0, single buffered']
    #allocation4 [shape = 's32[1]{0}', space=sflag, size = 0x4, scoped, tag = 'scoped memory for discriminator_forward.1']
    %9 = vsyncpa [#allocation4], 0
    // Predicated region
    $region2: #{discriminator_forward.1} parent=1 // pred_check
      _
    $region3: #{discriminator_forward.1} parent=1 // pred_check_branch
      %11 = sbr.rel (0) target = $region5
    $region4: #{discriminator_forward.1} parent=1 // pred_region
      _
    $region5: #{discriminator_forward.1} parent=1 // pred_fallthru
      _
    // Predicated region
    $region6: #{discriminator_forward.1} parent=1 // pred_check
      _
    $region7: #{discriminator_forward.1} parent=1 // pred_check_branch
      %13 = sbr.rel (0) target = $region9
    $region8: #{discriminator_forward.1} parent=1 // pred_region
      _
    $region9: #{discriminator_forward.1} parent=1 // pred_fallthru
      _
    // Predicated region
    $region10: #{discriminator_forward.1} parent=1 // pred_check
      _
    $region11: #{discriminator_forward.1} parent=1 // pred_check_branch
      %15 = sbr.rel (0) target = $region13
    $region12: #{discriminator_forward.1} parent=1 // pred_region
      _
    $region13: #{discriminator_forward.1} parent=1 // pred_fallthru
      _
    %v16 = vld [vmem:[%s0] sm:$0xff]
    %v17 = vld [vmem:[%s0 + $0x8] sm:$0xff]
    %v18 = vld [vmem:[%s0 + $0x10] sm:$0xff]
    %v19 = vld [vmem:[%s0 + $0x18] sm:$0xff]
    %v20 = vld [vmem:[%s0 + $0x20] sm:$0xff]
    %v21 = vld [vmem:[%s0 + $0x28] sm:$0xff]
    %v22 = vld [vmem:[%s0 + $0x30] sm:$0xff]
    %v23 = vld [vmem:[%s0 + $0x38] sm:$0xff]
    %v24 = vld [vmem:[%s0 + $0x40] sm:$0xff]
    %v25 = vld [vmem:[%s0 + $0x48] sm:$0xff]
    %v26 = vld [vmem:[%s0 + $0x50] sm:$0xff]
    %v27 = vld [vmem:[%s0 + $0x58] sm:$0xff]
    %v28 = vld [vmem:[%s0 + $0x60] sm:$0xff]
    %v29 = vld [vmem:[%s0 + $0x68] sm:$0xff]
    %v30 = vld [vmem:[%s0 + $0x70] sm:$0xff]
    %v31 = vld [vmem:[%s0 + $0x78] sm:$0xff]
    %v32 = vld [vmem:[%s0 + $0x80] sm:$0xff]
    %v33 = vld [vmem:[%s0 + $0x88] sm:$0xff]
    %v34 = vld [vmem:[%s0 + $0x90] sm:$0xff]
    %v35 = vld [vmem:[%s0 + $0x98] sm:$0xff]
    %v36 = vld [vmem:[%s0 + $0xa0] sm:$0xff]
    %v37 = vld [vmem:[%s0 + $0xa8] sm:$0xff]
    %v38 = vld [vmem:[%s0 + $0xb0] sm:$0xff]
    %v39 = vld [vmem:[%s0 + $0xb8] sm:$0xff]
    %v40 = vld [vmem:[%s0 + $0xc0] sm:$0xff]
    %v41 = vld [vmem:[%s0 + $0xc8] sm:$0xff]
    %v42 = vld [vmem:[%s0 + $0xd0] sm:$0xff]
    %v43 = vld [vmem:[%s0 + $0xd8] sm:$0xff]
    %v44 = vld [vmem:[%s0 + $0xe0] sm:$0xff]
    %v45 = vld [vmem:[%s0 + $0xe8] sm:$0xff]
    %v46 = vld [vmem:[%s0 + $0xf0] sm:$0xff]
    %v47 = vld [vmem:[%s0 + $0xf8] sm:$0xff]
    %v48 = vld [vmem:[%s0 + $0x100] sm:$0xff]
    %v49 = vld [vmem:[%s0 + $0x108] sm:$0xff]
    %v50 = vld [vmem:[%s0 + $0x110] sm:$0xff]
    %v51 = vld [vmem:[%s0 + $0x118] sm:$0xff]
    %v52 = vld [vmem:[%s0 + $0x120] sm:$0xff]
    %v53 = vld [vmem:[%s0 + $0x128] sm:$0xff]
    %v54 = vld [vmem:[%s0 + $0x130] sm:$0xff]
    %v55 = vld [vmem:[%s0 + $0x138] sm:$0xff]
    %v56 = vld [vmem:[%s0 + $0x140] sm:$0xff]
    %v57 = vld [vmem:[%s0 + $0x148] sm:$0xff]
    %v58 = vld [vmem:[%s0 + $0x150] sm:$0xff]
    %v59 = vld [vmem:[%s0 + $0x158] sm:$0xff]
    %v60 = vld [vmem:[%s0 + $0x160] sm:$0xff]
    %v61 = vld [vmem:[%s0 + $0x168] sm:$0xff]
    %v62 = vld [vmem:[%s0 + $0x170] sm:$0xff]
    %v63 = vld [vmem:[%s0 + $0x178] sm:$0xff]
    %v64 = vld [vmem:[%s1] sm:$0xff]
    %v65 = vld [vmem:[%s1 + $0x8] sm:$0xff]
    %v66 = vld [vmem:[%s1 + $0x10] sm:$0xff]
    %v67 = vld [vmem:[%s1 + $0x18] sm:$0xff]
    %v68 = vld [vmem:[%s1 + $0x20] sm:$0xff]
    %v69 = vld [vmem:[%s1 + $0x28] sm:$0xff]
    %v70 = vld [vmem:[%s1 + $0x30] sm:$0xff]
    %v71 = vld [vmem:[%s1 + $0x38] sm:$0xff]
    %s72 = sld [smem:[#allocation2]]
    %73 = vxpose.xlu0.b32.start [1/16] %v16, 128
    %74 = vxpose.xlu0.b32.cont [2/16] %v17, 128
    %75 = vxpose.xlu0.b32.cont [3/16] %v18, 128
    %76 = vxpose.xlu0.b32.cont [4/16] %v19, 128
    %77 = vxpose.xlu0.b32.cont [5/16] %v20, 128
    %78 = vxpose.xlu0.b32.cont [6/16] %v21, 128
    %79 = vxpose.xlu0.b32.cont [7/16] %v22, 128
    %80 = vxpose.xlu0.b32.cont [8/16] %v23, 128
    %81 = vxpose.xlu0.b32.cont [9/16] %v24, 128
    %82 = vxpose.xlu0.b32.cont [10/16] %v25, 128
    %83 = vxpose.xlu0.b32.cont [11/16] %v26, 128
    %84 = vxpose.xlu0.b32.cont [12/16] %v27, 128
    %85 = vxpose.xlu0.b32.cont [13/16] %v28, 128
    %86 = vxpose.xlu0.b32.cont [14/16] %v29, 128
    %87 = vxpose.xlu0.b32.cont [15/16] %v30, 128
    %88 = vxpose.xlu0.b32.end [16/16] %v31, 128
    %v89 = vpop.trf.xlu0
    %v90 = vpop.trf.xlu0
    %v91 = vpop.trf.xlu0
    %v92 = vpop.trf.xlu0
    %v93 = vpop.trf.xlu0
    %v94 = vpop.trf.xlu0
    %v95 = vpop.trf.xlu0
    %v96 = vpop.trf.xlu0
    %v97 = vpop.trf.xlu0
    %v98 = vpop.trf.xlu0
    %v99 = vpop.trf.xlu0
    %v100 = vpop.trf.xlu0
    %v101 = vpop.trf.xlu0
    %v102 = vpop.trf.xlu0
    %v103 = vpop.trf.xlu0
    %v104 = vpop.trf.xlu0
    %105 = vxpose.xlu0.b32.start [1/16] %v32, 128
    %106 = vxpose.xlu0.b32.cont [2/16] %v33, 128
    %107 = vxpose.xlu0.b32.cont [3/16] %v34, 128
    %108 = vxpose.xlu0.b32.cont [4/16] %v35, 128
    %109 = vxpose.xlu0.b32.cont [5/16] %v36, 128
    %110 = vxpose.xlu0.b32.cont [6/16] %v37, 128
    %111 = vxpose.xlu0.b32.cont [7/16] %v38, 128
    %112 = vxpose.xlu0.b32.cont [8/16] %v39, 128
    %113 = vxpose.xlu0.b32.cont [9/16] %v40, 128
    %114 = vxpose.xlu0.b32.cont [10/16] %v41, 128
    %115 = vxpose.xlu0.b32.cont [11/16] %v42, 128
    %116 = vxpose.xlu0.b32.cont [12/16] %v43, 128
    %117 = vxpose.xlu0.b32.cont [13/16] %v44, 128
    %118 = vxpose.xlu0.b32.cont [14/16] %v45, 128
    %119 = vxpose.xlu0.b32.cont [15/16] %v46, 128
    %120 = vxpose.xlu0.b32.end [16/16] %v47, 128
    %v121 = vpop.trf.xlu0
    %v122 = vpop.trf.xlu0
    %v123 = vpop.trf.xlu0
    %v124 = vpop.trf.xlu0
    %v125 = vpop.trf.xlu0
    %v126 = vpop.trf.xlu0
    %v127 = vpop.trf.xlu0
    %v128 = vpop.trf.xlu0
    %v129 = vpop.trf.xlu0
    %v130 = vpop.trf.xlu0
    %v131 = vpop.trf.xlu0
    %v132 = vpop.trf.xlu0
    %v133 = vpop.trf.xlu0
    %v134 = vpop.trf.xlu0
    %v135 = vpop.trf.xlu0
    %v136 = vpop.trf.xlu0
    %137 = vxpose.xlu0.b32.start [1/16] %v48, 128
    %138 = vxpose.xlu0.b32.cont [2/16] %v49, 128
    %139 = vxpose.xlu0.b32.cont [3/16] %v50, 128
    %140 = vxpose.xlu0.b32.cont [4/16] %v51, 128
    %141 = vxpose.xlu0.b32.cont [5/16] %v52, 128
    %142 = vxpose.xlu0.b32.cont [6/16] %v53, 128
    %143 = vxpose.xlu0.b32.cont [7/16] %v54, 128
    %144 = vxpose.xlu0.b32.cont [8/16] %v55, 128
    %145 = vxpose.xlu0.b32.cont [9/16] %v56, 128
    %146 = vxpose.xlu0.b32.cont [10/16] %v57, 128
    %147 = vxpose.xlu0.b32.cont [11/16] %v58, 128
    %148 = vxpose.xlu0.b32.cont [12/16] %v59, 128
    %149 = vxpose.xlu0.b32.cont [13/16] %v60, 128
    %150 = vxpose.xlu0.b32.cont [14/16] %v61, 128
    %151 = vxpose.xlu0.b32.cont [15/16] %v62, 128
    %152 = vxpose.xlu0.b32.end [16/16] %v63, 128
    %v153 = vpop.trf.xlu0
    %v154 = vpop.trf.xlu0
    %v155 = vpop.trf.xlu0
    %v156 = vpop.trf.xlu0
    %v157 = vpop.trf.xlu0
    %v158 = vpop.trf.xlu0
    %v159 = vpop.trf.xlu0
    %v160 = vpop.trf.xlu0
    %v161 = vpop.trf.xlu0
    %v162 = vpop.trf.xlu0
    %v163 = vpop.trf.xlu0
    %v164 = vpop.trf.xlu0
    %v165 = vpop.trf.xlu0
    %v166 = vpop.trf.xlu0
    %v167 = vpop.trf.xlu0
    %v168 = vpop.trf.xlu0
    %170 = vset.pattern.permute.xlu0 0
    %171 = vperm.xlu0 %170, %v64
    %v172 = vpop.permute.xlu0 %171
    %175 = vset.pattern.permute.xlu0 0
    %176 = vperm.xlu0 %175, %v65
    %v177 = vpop.permute.xlu0 %176
    %180 = vset.pattern.permute.xlu0 0
    %181 = vperm.xlu0 %180, %v66
    %v182 = vpop.permute.xlu0 %181
    %185 = vset.pattern.permute.xlu0 0
    %186 = vperm.xlu0 %185, %v67
    %v187 = vpop.permute.xlu0 %186
    %190 = vset.pattern.permute.xlu0 0
    %191 = vperm.xlu0 %190, %v68
    %v192 = vpop.permute.xlu0 %191
    %195 = vset.pattern.permute.xlu0 0
    %196 = vperm.xlu0 %195, %v69
    %v197 = vpop.permute.xlu0 %196
    %200 = vset.pattern.permute.xlu0 0
    %201 = vperm.xlu0 %200, %v70
    %v202 = vpop.permute.xlu0 %201
    %205 = vset.pattern.permute.xlu0 0
    %206 = vperm.xlu0 %205, %v71
    %v207 = vpop.permute.xlu0 %206
    %v209 = vmul.f32 %v89, %v172
    %v210 = vmul.f32 %v121, %v172
    %v211 = vmul.f32 %v153, %v172
    %v212 = vmul.f32 %v90, %v177
    %v213 = vmul.f32 %v122, %v177
    %v214 = vmul.f32 %v154, %v177
    %v215 = vmul.f32 %v91, %v182
    %v216 = vmul.f32 %v123, %v182
    %v217 = vmul.f32 %v155, %v182
    %v218 = vmul.f32 %v92, %v187
    %v219 = vmul.f32 %v124, %v187
    %v220 = vmul.f32 %v156, %v187
    %v221 = vmul.f32 %v93, %v192
    %v222 = vmul.f32 %v125, %v192
    %v223 = vmul.f32 %v157, %v192
    %v224 = vmul.f32 %v94, %v197
    %v225 = vmul.f32 %v126, %v197
    %v226 = vmul.f32 %v158, %v197
    %v227 = vmul.f32 %v95, %v202
    %v228 = vmul.f32 %v127, %v202
    %v229 = vmul.f32 %v159, %v202
    %v230 = vmul.f32 %v96, %v207
    %v231 = vmul.f32 %v128, %v207
    %v232 = vmul.f32 %v160, %v207
    %v233 = vadd.f32 %v209, %v212
    %v234 = vadd.f32 %v233, %v215
    %v235 = vadd.f32 %v234, %v218
    %v236 = vadd.f32 %v235, %v221
    %v237 = vadd.f32 %v236, %v224
    %v238 = vadd.f32 %v237, %v227
    %v239 = vadd.f32 %v238, %v230
    %v240 = vrot.slane %v239, 4
    %v241 = vadd.f32 %v239, %v240
    %v242 = vrot.slane %v241, 2
    %v243 = vadd.f32 %v241, %v242
    %v244 = vrot.slane %v243, 1
    %v245 = vadd.f32 %v243, %v244
    %v246 = vadd.f32 %v210, %v213
    %v247 = vadd.f32 %v246, %v216
    %v248 = vadd.f32 %v247, %v219
    %v249 = vadd.f32 %v248, %v222
    %v250 = vadd.f32 %v249, %v225
    %v251 = vadd.f32 %v250, %v228
    %v252 = vadd.f32 %v251, %v231
    %v253 = vrot.slane %v252, 4
    %v254 = vadd.f32 %v252, %v253
    %v255 = vrot.slane %v254, 2
    %v256 = vadd.f32 %v254, %v255
    %v257 = vrot.slane %v256, 1
    %v258 = vadd.f32 %v256, %v257
    %v259 = vadd.f32 %v211, %v214
    %v260 = vadd.f32 %v259, %v217
    %v261 = vadd.f32 %v260, %v220
    %v262 = vadd.f32 %v261, %v223
    %v263 = vadd.f32 %v262, %v226
    %v264 = vadd.f32 %v263, %v229
    %v265 = vadd.f32 %v264, %v232
    %v266 = vrot.slane %v265, 4
    %v267 = vadd.f32 %v265, %v266
    %v268 = vrot.slane %v267, 2
    %v269 = vadd.f32 %v267, %v268
    %v270 = vrot.slane %v269, 1
    %v271 = vadd.f32 %v269, %v270
    %v272 = vstv %s72
    %v273 = vadd.f32 %v245, %v272
    %v274 = vadd.f32 %v258, %v272
    %v275 = vadd.f32 %v271, %v272
    %vm276 = vcmp.ge.f32.partialorder %v273, 0.0
    %vm277 = vcmp.ge.f32.partialorder %v274, 0.0
    %vm278 = vcmp.ge.f32.partialorder %v275, 0.0
    %v279 = vmul.f32 %v273, 0.2
    %v280 = vmul.f32 %v274, 0.2
    %v281 = vmul.f32 %v275, 0.2
    %v282 = vsel %vm276, %v273, %v279
    %v283 = vsel %vm277, %v274, %v280
    %v284 = vsel %vm278, %v275, %v281
    %v285 = vxor.u32 %v282, 2147483648
    %v286 = vxor.u32 %v283, 2147483648
    %v287 = vxor.u32 %v284, 2147483648
    %v288 = vmul.f32 %v285, 1.442695
    %v289 = vpow.pop %v288
    %v290 = vmul.f32 %v286, 1.442695
    %v291 = vpow.pop %v290
    %v292 = vmul.f32 %v287, 1.442695
    %v293 = vpow.pop %v292
    %v294 = vadd.f32 %v289, 1.0
    %v295 = vadd.f32 %v291, 1.0
    %v296 = vadd.f32 %v293, 1.0
    %v297 = vrcp.pop %v294
    %v298 = vmul.f32 %v294, %v297
    %v299 = vsub.f32 1.0, %v298
    %v300 = vmul.f32 %v297, %v299
    %v301 = vadd.f32 %v297, %v300
    %vm302 = vweird.f32 %v294
    %vm303 = vweird.f32 %v297
    %vm304 = vmor %vm302, %vm303
    %v305 = vsel %vm304, %v297, %v301
    %v306 = vand.u32 2147483647, %v294
    %vm307 = vcmp.eq.f32.partialorder %v306, 8.507059e+37
    %v308 = vand.u32 %v294, 2147483648
    %v309 = vor.u32 1.1754944e-38, %v308
    %v310 = vsel %vm307, %v309, %v305
    %v311 = vmul.f32 1.0, %v310
    %v312 = vrcp.pop %v295
    %v313 = vmul.f32 %v295, %v312
    %v314 = vsub.f32 1.0, %v313
    %v315 = vmul.f32 %v312, %v314
    %v316 = vadd.f32 %v312, %v315
    %vm317 = vweird.f32 %v295
    %vm318 = vweird.f32 %v312
    %vm319 = vmor %vm317, %vm318
    %v320 = vsel %vm319, %v312, %v316
    %v321 = vand.u32 2147483647, %v295
    %vm322 = vcmp.eq.f32.partialorder %v321, 8.507059e+37
    %v323 = vand.u32 %v295, 2147483648
    %v324 = vor.u32 1.1754944e-38, %v323
    %v325 = vsel %vm322, %v324, %v320
    %v326 = vmul.f32 1.0, %v325
    %v327 = vrcp.pop %v296
    %v328 = vmul.f32 %v296, %v327
    %v329 = vsub.f32 1.0, %v328
    %v330 = vmul.f32 %v327, %v329
    %v331 = vadd.f32 %v327, %v330
    %vm332 = vweird.f32 %v296
    %vm333 = vweird.f32 %v327
    %vm334 = vmor %vm332, %vm333
    %v335 = vsel %vm334, %v327, %v331
    %v336 = vand.u32 2147483647, %v296
    %vm337 = vcmp.eq.f32.partialorder %v336, 8.507059e+37
    %v338 = vand.u32 %v296, 2147483648
    %v339 = vor.u32 1.1754944e-38, %v338
    %v340 = vsel %vm337, %v339, %v335
    %v341 = vmul.f32 1.0, %v340
    %v345 = vrot.slane %v326, 7
    %v346 = vrot.slane %v341, 6
    %vm347 = vcmask 1040384
    %v348 = vsel %vm347, %v311, %v345
    %vm349 = vcmask 1041408
    %v350 = vsel %vm349, %v348, %v346
    %v352 = vlaneseq
    %vm353 = vcmp.ge.s32.totalorder %v352, 0
    %vm354 = vcmp.lt.s32.totalorder %v352, 384
    %vm355 = vmand %vm353, %vm354
    %356 = vst.msk [vmem:[#allocation3] sm:$0x7] %vm355, %v350
    // Predicated region
    $region14: #{discriminator_forward.1} parent=1 // pred_check
      _
    $region15: #{discriminator_forward.1} parent=1 // pred_check_branch
      %358 = sbr.rel (0) target = $region17
    $region16: #{discriminator_forward.1} parent=1 // pred_region
      %360 = vsyncadd [#allocation4], 0
      %s362 = sshll.u32 [#allocation3], 4
      %s363 = int_to_ptr.vmem [resolvable:$true] %s362
      %s364 = sshll.u32 %s3, 4
      %s365 = int_to_ptr.hbm [resolvable:$true] %s364
      %367 = dma.vmem_to_hbm [thread:$0]  %s363, 48, %s365, [#allocation4]
    $region17: #{discriminator_forward.1} parent=1 // pred_fallthru
      _
    // Predicated region
    $region18: #{discriminator_forward.1} parent=1 // pred_check
      _
    $region19: #{discriminator_forward.1} parent=1 // pred_check_branch
      %369 = sbr.rel (0) target = $region21
    $region20: #{discriminator_forward.1} parent=1 // pred_region
      %371 = dma.done [#allocation4], 48
    $region21: #{discriminator_forward.1} parent=1 // pred_fallthru
      _
    %372 = vsyncpa [#allocation4], 1

</llo_original>
